<compile_context>
chip_gen: v7x
topology: tpu7x:2x2x1
jax: 0.10.0
libtpu: 0.0.40
codegen_flags: <defaults>
</compile_context>

<pallas_src>
import functools
import numpy as np
import jax
import jax.numpy as jnp
from jax.experimental import pallas as pl
from jax.experimental.pallas import tpu as pltpu


# ----------------------------------------------------------------------------
# Host-side (glue): deterministic not-a-knot cubic-spline basis matrix.
# W[t, k] = value at time t of the spline interpolating unit vector e_k at the
# knot positions (same boundary condition as scipy.CubicSpline's default).
# ----------------------------------------------------------------------------
def notaknot_cubic_basis(T: int, knot: int) -> np.ndarray:
    xk = np.arange(0.0, T, (T - 1) / (knot + 1))            # knot x-positions
    if len(xk) != knot + 2:                                  # float-step arange edge case
        xk = np.linspace(0.0, T - 1, knot + 2)
    xe = np.arange(T, dtype=np.float64)                      # evaluation points
    n = len(xk) - 1
    h = np.diff(xk)

    # Solve A @ M = Bm @ y for second derivatives M (linear in data y).
    A = np.zeros((n + 1, n + 1))
    Bm = np.zeros((n + 1, n + 1))
    for i in range(1, n):
        A[i, i - 1] = h[i - 1]
        A[i, i] = 2.0 * (h[i - 1] + h[i])
        A[i, i + 1] = h[i]
        Bm[i, i - 1] = 6.0 / h[i - 1]
        Bm[i, i] = -6.0 / h[i - 1] - 6.0 / h[i]
        Bm[i, i + 1] = 6.0 / h[i]
    # not-a-knot: S''' continuous at x1 and x_{n-1}
    A[0, 0] = -1.0 / h[0]
    A[0, 1] = 1.0 / h[0] + 1.0 / h[1]
    A[0, 2] = -1.0 / h[1]
    A[n, n - 2] = -1.0 / h[n - 2]
    A[n, n - 1] = 1.0 / h[n - 2] + 1.0 / h[n - 1]
    A[n, n] = -1.0 / h[n - 1]
    Msolve = np.linalg.solve(A, Bm)                           # M = Msolve @ y

    idx = np.clip(np.searchsorted(xk, xe, side="right") - 1, 0, n - 1)
    I = np.eye(n + 1)
    W = np.zeros((len(xe), n + 1))
    for j, xv in enumerate(xe):
        i = int(idx[j])
        dx = xv - xk[i]
        Mi, Mi1 = Msolve[i], Msolve[i + 1]
        bi = (I[i + 1] - I[i]) / h[i] - h[i] * (2.0 * Mi + Mi1) / 6.0
        W[j] = I[i] + bi * dx + Mi * dx * dx / 2.0 + (Mi1 - Mi) * dx ** 3 / (6.0 * h[i])
    return W.astype(np.float32)                               # (T, knot+2)


# ----------------------------------------------------------------------------
# Pallas kernel: per-row spline matmul + single-multiply magnitude warp.
# ----------------------------------------------------------------------------
def _magwarp_kernel(yy_ref, w_ref, x_ref, o_ref, *, tt, n_t):
    # yy_ref: (RT, KP)  mask-folded knot values (K zero-padded to KP)
    # w_ref : (KP, TW)  full spline basis, VMEM-resident (block index always (0,0))
    # x_ref : (RT, TT)  input rows ;  o_ref: (RT, TT) output rows
    if n_t == 1:
        w = w_ref[...]
    else:
        t0 = pl.multiple_of(pl.program_id(1) * tt, 128)
        w = w_ref[:, pl.ds(t0, tt)]
    # Tiny (RT, KP) x (KP, TT) contraction on the MXU; kernel is HBM-bound.
    curve = jnp.dot(yy_ref[...], w, preferred_element_type=jnp.float32)   # (RT, TT)
    xv = x_ref[...]
    if o_ref.dtype == jnp.float32:
        o_ref[...] = xv * curve
    else:
        # bf16/fp16: cast curve once, keep the elementwise multiply low-precision.
        o_ref[...] = xv * curve.astype(o_ref.dtype)


def _round_up(a: int, b: int) -> int:
    return -(-a // b) * b


def magwarp_pallas(x, yy, mask_f, W_tk, *, row_tile=256, t_tile_max=2048):
    """x: (B,C,T); yy: (B,knot+2,C); mask_f: (B,1,1) {0,1};
    W_tk: (T, knot+2) spline basis (numpy or jax array)."""
    B, C, T = x.shape
    K = yy.shape[1]
    R = B * C
    KP = _round_up(K, 8)                          # sublane-aligned contraction dim
    out_dtype = x.dtype
    itemsize = jnp.dtype(out_dtype).itemsize
    sub = 8 * max(1, 4 // itemsize)               # 8 / 16 / 32 for 32/16/8-bit

    # Fold the Bernoulli mask into the (tiny) knot values.  The spline basis
    # reproduces constants, so masked-off samples get a ~1.0 curve (passthrough
    # up to ~1e-7 f32 rounding) and masked samples get the full warp.
    eff_yy = 1.0 + mask_f.astype(jnp.float32) * (yy.astype(jnp.float32) - 1.0)  # (B,K,C)
    yy_rows = jnp.transpose(eff_yy, (0, 2, 1)).reshape(R, K)                    # (R,K)
    x_rows = x.reshape(R, T)                                                    # free
    w_kt = jnp.asarray(W_tk, dtype=jnp.float32).T                               # (K,T)

    if T < 128:
        # TODO(synk): tiny-T path stays in plain XLA — a <128-lane Pallas block
        # means masked partial stores and the fixed call overhead dominates.
        curve = jnp.dot(yy_rows, w_kt)                                          # (R,T)
        return (x_rows.astype(jnp.float32) * curve).astype(out_dtype).reshape(B, C, T)

    # --- T tiling: lane-dense multiples of 128, never wider than T ---
    tt = min(t_tile_max, 128 * (T // 128))
    n_t = pl.cdiv(T, tt)                          # ragged last block handled by Pallas

    # --- row tiling: sublane-aligned tiles for this dtype ---
    rt = max(sub, (min(row_tile, R) // sub) * sub)
    n_r = pl.cdiv(R, rt)
    # Give both TensorCores work on megacore parts (v7x): need >= 2 grid steps.
    if n_r * n_t < 2 and R >= 2 * sub:
        rt = max(sub, ((R // 2) // sub) * sub)
        n_r = pl.cdiv(R, rt)

    # Pad only the tiny operands (never the big x / out tensors).
    # Zero pads are required for correctness: padded W rows contribute nothing.
    yy_rows = jnp.pad(yy_rows, ((0, 0), (0, KP - K)))             # (R, KP)
    TW = n_t * tt                                                 # in-kernel pl.ds bound
    w_kt = jnp.pad(w_kt, ((0, KP - K), (0, TW - T)))              # (KP, TW)

    kernel = functools.partial(_magwarp_kernel, tt=tt, n_t=n_t)

    out = pl.pallas_call(
        kernel,
        out_shape=jax.ShapeDtypeStruct((R, T), out_dtype),
        grid=(n_r, n_t),
        in_specs=[
            pl.BlockSpec((rt, KP), lambda i, j: (i, 0)),   # knot values (mask folded)
            pl.BlockSpec((KP, TW), lambda i, j: (0, 0)),   # full basis, VMEM-resident
            pl.BlockSpec((rt, tt), lambda i, j: (i, j)),   # x rows
        ],
        out_specs=pl.BlockSpec((rt, tt), lambda i, j: (i, j)),
        compiler_params=pltpu.CompilerParams(
            dimension_semantics=("parallel", "parallel")),
        cost_estimate=pl.CostEstimate(
            flops=R * T * (2 * KP + 1),
            transcendentals=0,
            bytes_accessed=2 * R * T * itemsize + R * KP * 4 + KP * TW * 4),
    )(yy_rows, w_kt, x_rows)

    return out.reshape(B, C, T)


if __name__ == "__main__":
    # Small shapes; R=15 and T=200 deliberately exercise the ragged (no-pad)
    # row / lane blocks that the grid now handles directly.
    B, C, T = 3, 5, 200
    sigma, knot, p = 0.2, 4, 0.5
    K = knot + 2

    key = jax.random.PRNGKey(0)
    kx, kyy, km = jax.random.split(key, 3)

    x = jax.random.normal(kx, (B, C, T), dtype=jnp.float32)
    # yy ~ N(loc=1.0, scale=sigma), shape (B, knot+2, C)  (np.random.normal analogue)
    yy = 1.0 + sigma * jax.random.normal(kyy, (B, K, C), dtype=jnp.float32)
    # mask = rand(B,1,1) < p  (torch.rand analogue), kept as {0,1} float
    mask_f = (jax.random.uniform(km, (B, 1, 1)) < p).astype(jnp.float32)

    W_tk = notaknot_cubic_basis(T, knot)                      # (T, K)
    # Sanity: the basis reproduces constants (rows sum to 1) -> mask fold valid.
    assert np.allclose(W_tk.sum(axis=1), 1.0, atol=1e-4)

    out = jax.block_until_ready(magwarp_pallas(x, yy, mask_f, W_tk))

    # Plain-JAX reference with the same basis / randoms (original blend form).
    curve_btc = jnp.einsum("tk,bkc->btc", jnp.asarray(W_tk, jnp.float32), yy)
    curve_bct = jnp.transpose(curve_btc, (0, 2, 1))           # (B, C, T)
    ref = x * (1.0 - mask_f) + (x * curve_bct) * mask_f

    np.testing.assert_allclose(np.asarray(out), np.asarray(ref),
                               rtol=1e-4, atol=1e-4)
    print("KERNEL_OK")
</pallas_src>

<mosaic_0001>
module attributes {stable_mosaic.version = 11 : i64} {
  func.func @_magwarp_kernel(%arg0: i32, %arg1: i32, %arg2: memref<8x8xf32, #tpu.memory_space<vmem>>, %arg3: memref<8x256xf32, #tpu.memory_space<vmem>>, %arg4: memref<8x128xf32, #tpu.memory_space<vmem>>, %arg5: memref<8x128xf32, #tpu.memory_space<vmem>>) attributes {dimension_semantics = [#tpu.dimension_semantics<parallel>, #tpu.dimension_semantics<parallel>], iteration_bounds = array<i64: 2, 2>, scalar_prefetch = 0 : i64, scratch_operands = 0 : i64, tpu.core_type = #tpu.core_type<tc>, window_params = [{transform_indices = @transform_0, window_bounds = array<i64: 8, 8>}, {pipeline_mode = #tpu.pipeline_mode<synchronous>, transform_indices = @transform_1, window_bounds = array<i64: 8, 256>}, {transform_indices = @transform_2, window_bounds = array<i64: 8, 128>}, {transform_indices = @transform_3, window_bounds = array<i64: 8, 128>}]} {
    %c128_i32 = arith.constant 128 : i32
    %0 = arith.muli %arg1, %c128_i32 : i32
    %1 = tpu.assume_multiple %0, 128 : i32
    %c0 = arith.constant 0 : index
    %2 = arith.index_cast %1 : i32 to index
    %3 = vector.load %arg3[%c0, %2] : memref<8x256xf32, #tpu.memory_space<vmem>>, vector<8x128xf32>
    %c0_0 = arith.constant 0 : index
    %c0_1 = arith.constant 0 : index
    %4 = vector.load %arg2[%c0_0, %c0_1] : memref<8x8xf32, #tpu.memory_space<vmem>>, vector<8x8xf32>
    %cst = arith.constant dense<0.000000e+00> : vector<8x128xf32>
    %5 = tpu.matmul %4, %3, %cst {dimension_numbers = #tpu.dot_dimension_numbers<[1], [0], [0], [1], [0, 0, 1, 1], [], []>} : vector<8x8xf32>, vector<8x128xf32>, vector<8x128xf32> -> vector<8x128xf32>
    %c0_2 = arith.constant 0 : index
    %c0_3 = arith.constant 0 : index
    %6 = vector.load %arg4[%c0_2, %c0_3] : memref<8x128xf32, #tpu.memory_space<vmem>>, vector<8x128xf32>
    %7 = arith.mulf %6, %5 : vector<8x128xf32>
    %c0_4 = arith.constant 0 : index
    %c0_5 = arith.constant 0 : index
    %8 = vector.load %arg5[%c0_4, %c0_5] : memref<8x128xf32, #tpu.memory_space<vmem>>, vector<8x128xf32>
    tpu.vector_store %arg5[%c0_4, %c0_5], %7 {strides = array<i32>} : memref<8x128xf32, #tpu.memory_space<vmem>>, vector<8x128xf32>,
    return
  }
  func.func @transform_0(%arg0: i32, %arg1: i32) -> (i32, i32) {
    %c0_i32 = arith.constant 0 : i32
    %c0_i32_0 = arith.constant 0 : i32
    return %arg0, %c0_i32 : i32, i32
  }
  func.func @transform_1(%arg0: i32, %arg1: i32) -> (i32, i32) {
    %c0_i32 = arith.constant 0 : i32
    %c0_i32_0 = arith.constant 0 : i32
    %c0_i32_1 = arith.constant 0 : i32
    return %c0_i32, %c0_i32_0 : i32, i32
  }
  func.func @transform_2(%arg0: i32, %arg1: i32) -> (i32, i32) {
    %c0_i32 = arith.constant 0 : i32
    return %arg0, %arg1 : i32, i32
  }
  func.func @transform_3(%arg0: i32, %arg1: i32) -> (i32, i32) {
    %c0_i32 = arith.constant 0 : i32
    return %arg0, %arg1 : i32, i32
  }
}

</mosaic_0001>

<llo_original>
// kernel: tpu_custom_call.1
$region0: #{tpu_custom_call.1}
  #allocation0 [shape = 'u32[]', space=smem, size = 0x4, offset = 0x4, fixed_abs, tag = 'smem constant byte address 0x4 - core index']
  #allocation1 [shape = 'u32[144,128]{1,0:T(1,128)}', space=vmem, size = 0x12000, scoped, tag = 'internal scratch']
  %s0 = inlined_call_operand.vmem [shape: f32[15,8], index: 0, kind: input, shape index: {}]
  %s1 = inlined_call_operand.vmem [shape: f32[8,256], index: 1, kind: input, shape index: {}]
  %s2 = inlined_call_operand.hbm [shape: f32[15,200], index: 2, kind: input, shape index: {}]
  %s3 = inlined_call_operand.hbm [shape: f32[15,200], index: 3, kind: output, shape index: {}]
  %s4 = sld [smem:[#allocation0]]
  $region49: #{tpu_custom_call.1} parent=0
    _
  %s6 = ssub.s32 1, %s4
  %s7 = scalar_select 0, %s6, %s4
  $region1: #{tpu_custom_call.1} parent=0
    #allocation2 [shape = 'u8[8192]{0}', space=vmem, size = 0x2000, scoped, tag = 'input window, operand 2']
    #allocation3 [shape = 's32[2]{0}', space=sflag, size = 0x8, scoped, tag = 'scoped memory for tpu_custom_call.1']
    #allocation4 [shape = 's32[2]{0}', space=sflag, size = 0x8, scoped, tag = 'scoped memory for tpu_custom_call.1']
    #allocation5 [shape = 'u8[8192]{0}', space=vmem, size = 0x2000, scoped, tag = 'output window, operand 0']
    %8 = vsyncpa [#allocation3], 0
    %s9 = scalar_lea.sflag [#allocation3], 1
    %10 = vsyncpa %s9, 0
    %11 = vsyncpa [#allocation4], 0
    %s12 = scalar_lea.sflag [#allocation4], 1
    %13 = vsyncpa %s12, 0
    loop: start=0, step=1, limit=6
    $region2: #{tpu_custom_call.1} parent=1 // loop_pre_header
      _
    $region3: #{tpu_custom_call.1} parent=1 // loop_header
      %s15 = sphi 0, %s19
      %p16 = scmp.ge.s32.totalorder %s15, 6
      %s22 = sphi 0, %s34
      %s23 = sphi 0, %s30
      %s24 = sphi 0, %s22
      %s25 = sphi 0, %s23
      %s26 = sphi 0, %s24
      %s27 = sphi 0, %s25
      %s37 = sphi 0, %s39
      %s40 = sphi 0, %s37
      %s41 = sphi 0, %s40
      %s57 = sphi 0, %s41
      %s61 = sphi 0, %s61
      %s63 = sphi 0, %s61
      %s64 = sphi 0, %s63
      %s78 = sphi 0, %s64
      %s86 = sphi 0, %s88
      %s89 = sphi 0, %s86
      %s90 = sphi 0, %s89
      %s106 = sphi 0, %s90
      %s114 = sphi 0, %s116
      %s117 = sphi 0, %s114
      %s118 = sphi 0, %s117
      %s134 = sphi 0, %s118
    $region4: #{tpu_custom_call.1} parent=1 // loop_header_branch
      %18 = sbr.rel (%p16) target = $region8
    $region5: #{tpu_custom_call.1} parent=1 // loop_body
      %s20 = ssub.s32 %s15, 1
      %s21 = ssub.s32 %s15, 2
      %s28 = sadd.s32 1, %s23
      %p29 = scmp.ge.s32.totalorder %s28, 2
      %s30 = scalar_select %p29, 0, %s28
      %s31 = sadd.s32 1, %s22
      %s32 = scalar_select %p29, %s31, %s22
      %p33 = scmp.ge.s32.totalorder %s32, 2
      %s34 = scalar_select %p33, 0, %s32
      %s35 = ssub.s32 %s22, %s34
      %p36 = scmp.eq.s32.totalorder %s35, 0
      %s38 = sadd.s32 %s37, 1
      %s39 = scalar_select %p36, %s37, %s38
      %p42 = pneg %p36
      %p43 = scmp.eq.s32.totalorder %s15, 3
      %p44 = por %p42, %p43
      %p45 = scmp.ne.s32.totalorder %s37, %s40
      %p46 = scmp.eq.s32.totalorder %s15, 0
      %p47 = por %p45, %p46
      %p48 = scmp.ne.s32.totalorder %s37, %s40
      %p49 = scmp.eq.s32.totalorder %s20, 3
      %p50 = por %p48, %p49
      %p51 = scmp.ne.s32.totalorder %s40, %s41
      %p52 = scmp.eq.s32.totalorder %s20, 0
      %p53 = por %p51, %p52
      %p54 = scmp.ne.s32.totalorder %s40, %s41
      %p55 = scmp.eq.s32.totalorder %s21, 3
      %p56 = por %p54, %p55
      %p58 = scmp.ne.s32.totalorder %s41, %s57
      %p59 = scmp.eq.s32.totalorder %s21, 0
      %p60 = por %p58, %p59
      %s62 = sadd.s32 %s61, 1
      %p65 = scmp.eq.s32.totalorder %s15, 3
      %p66 = scmp.ne.s32.totalorder %s61, %s63
      %p67 = scmp.eq.s32.totalorder %s15, 0
      %p68 = por %p66, %p67
      %p69 = scmp.ne.s32.totalorder %s61, %s63
      %p70 = scmp.eq.s32.totalorder %s20, 3
      %p71 = por %p69, %p70
      %p72 = scmp.ne.s32.totalorder %s63, %s64
      %p73 = scmp.eq.s32.totalorder %s20, 0
      %p74 = por %p72, %p73
      %p75 = scmp.ne.s32.totalorder %s63, %s64
      %p76 = scmp.eq.s32.totalorder %s21, 3
      %p77 = por %p75, %p76
      %p79 = scmp.ne.s32.totalorder %s64, %s78
      %p80 = scmp.eq.s32.totalorder %s21, 0
      %p81 = por %p79, %p80
      %s82 = ssub.s32 %s22, %s34
      %s83 = ssub.s32 %s23, %s30
      %s84 = sor.u32 %s82, %s83
      %p85 = scmp.eq.s32.totalorder %s84, 0
      %s87 = sadd.s32 %s86, 1
      %s88 = scalar_select %p85, %s86, %s87
      %p91 = pneg %p85
      %p92 = scmp.eq.s32.totalorder %s15, 3
      %p93 = por %p91, %p92
      %p94 = scmp.ne.s32.totalorder %s86, %s89
      %p95 = scmp.eq.s32.totalorder %s15, 0
      %p96 = por %p94, %p95
      %p97 = scmp.ne.s32.totalorder %s86, %s89
      %p98 = scmp.eq.s32.totalorder %s20, 3
      %p99 = por %p97, %p98
      %p100 = scmp.ne.s32.totalorder %s89, %s90
      %p101 = scmp.eq.s32.totalorder %s20, 0
      %p102 = por %p100, %p101
      %p103 = scmp.ne.s32.totalorder %s89, %s90
      %p104 = scmp.eq.s32.totalorder %s21, 3
      %p105 = por %p103, %p104
      %p107 = scmp.ne.s32.totalorder %s90, %s106
      %p108 = scmp.eq.s32.totalorder %s21, 0
      %p109 = por %p107, %p108
      %s110 = ssub.s32 %s22, %s34
      %s111 = ssub.s32 %s23, %s30
      %s112 = sor.u32 %s110, %s111
      %p113 = scmp.eq.s32.totalorder %s112, 0
      %s115 = sadd.s32 %s114, 1
      %s116 = scalar_select %p113, %s114, %s115
      %p119 = pneg %p113
      %p120 = scmp.eq.s32.totalorder %s15, 3
      %p121 = por %p119, %p120
      %p122 = scmp.ne.s32.totalorder %s114, %s117
      %p123 = scmp.eq.s32.totalorder %s15, 0
      %p124 = por %p122, %p123
      %p125 = scmp.ne.s32.totalorder %s114, %s117
      %p126 = scmp.eq.s32.totalorder %s20, 3
      %p127 = por %p125, %p126
      %p128 = scmp.ne.s32.totalorder %s117, %s118
      %p129 = scmp.eq.s32.totalorder %s20, 0
      %p130 = por %p128, %p129
      %p131 = scmp.ne.s32.totalorder %s117, %s118
      %p132 = scmp.eq.s32.totalorder %s21, 3
      %p133 = por %p131, %p132
      %p135 = scmp.ne.s32.totalorder %s118, %s134
      %p136 = scmp.eq.s32.totalorder %s21, 0
      %p137 = por %p135, %p136
      %p138 = scmp.le.s32.totalorder 1, %s15
      %p139 = scmp.lt.s32.totalorder %s15, 5
      %p140 = pnand %p138, %p139
      %p141 = pneg %p140
      // Predicated region
      $region9: #{tpu_custom_call.1} parent=5 // pred_check
        _
      $region10: #{tpu_custom_call.1} parent=5 // pred_check_branch
        %143 = sbr.rel (%p140) target = $region12
      $region11: #{tpu_custom_call.1} parent=5 // pred_region
        %s144 = ssub.s32 %s15, 1
        // Predicated region
        $region13: #{tpu_custom_call.1} parent=11 // pred_check
          %p145 = pneg %p74
        $region14: #{tpu_custom_call.1} parent=11 // pred_check_branch
          %147 = sbr.rel (%p145) target = $region16
        $region15: #{tpu_custom_call.1} parent=11 // pred_region
          _
        $region16: #{tpu_custom_call.1} parent=11 // pred_fallthru
          _
      $region12: #{tpu_custom_call.1} parent=5 // pred_fallthru
        _
      %p148 = scmp.lt.s32.totalorder %s15, 4
      // Predicated region
      $region17: #{tpu_custom_call.1} parent=5 // pred_check
        %p149 = pneg %p148
      $region18: #{tpu_custom_call.1} parent=5 // pred_check_branch
        %151 = sbr.rel (%p149) target = $region20
      $region19: #{tpu_custom_call.1} parent=5 // pred_region
        // Predicated region
        $region21: #{tpu_custom_call.1} parent=19 // pred_check
          %p152 = pneg %p47
        $region22: #{tpu_custom_call.1} parent=19 // pred_check_branch
          %154 = sbr.rel (%p152) target = $region24
        $region23: #{tpu_custom_call.1} parent=19 // pred_region
          %p155 = scmp.lt.s32.totalorder %s22, 1
          %s156 = scalar_select %p155, %s22, 1
          %s157 = smul.addr %s156, 8
          %s158 = scalar_lea.vmem %s0, %s157
        $region24: #{tpu_custom_call.1} parent=19 // pred_fallthru
          _
        // Predicated region
        $region25: #{tpu_custom_call.1} parent=19 // pred_check
          %p159 = pneg %p96
        $region26: #{tpu_custom_call.1} parent=19 // pred_check_branch
          %161 = sbr.rel (%p159) target = $region28
        $region27: #{tpu_custom_call.1} parent=19 // pred_region
          %s162 = sand.u32 %s86, 1
          %s163 = scalar_lea.sflag [#allocation3], %s162
          %s164 = sand.u32 %s86, 1
          %s165 = smul.addr %s164, 8
          %s166 = scalar_lea.vmem [#allocation2], %s165
          %s168 = ssub.s32 128, 128
          %169 = vsyncadd %s163, %s168
          %s170 = smul.addr %s22, 2
          %s171 = sadd.s32 %s23, %s170
          %s172 = smul.addr %s171, 128
          %s173 = scalar_lea.hbm %s2, %s172
          %s175 = sshll.u32 %s166, 4
          %s176 = int_to_ptr.vmem [resolvable:$true] %s175
          %178 = dma.hbm_to_vmem [thread:$0]  %s173, 128, %s176, %s163
        $region28: #{tpu_custom_call.1} parent=19 // pred_fallthru
          _
      $region20: #{tpu_custom_call.1} parent=5 // pred_fallthru
        _
      %p179 = scmp.le.s32.totalorder 1, %s15
      %p180 = scmp.lt.s32.totalorder %s15, 5
      %p181 = pnand %p179, %p180
      %p182 = pneg %p181
      // Predicated region
      $region29: #{tpu_custom_call.1} parent=5 // pred_check
        _
      $region30: #{tpu_custom_call.1} parent=5 // pred_check_branch
        %184 = sbr.rel (%p181) target = $region32
      $region31: #{tpu_custom_call.1} parent=5 // pred_region
        %s185 = ssub.s32 %s15, 1
        %s186 = sand.u32 %s89, 1
        %s187 = scalar_lea.sflag [#allocation3], %s186
        %s188 = sand.u32 %s89, 1
        %s189 = smul.addr %s188, 8
        %s190 = scalar_lea.vmem [#allocation2], %s189
        // Predicated region
        $region33: #{tpu_custom_call.1} parent=31 // pred_check
          %p191 = pneg %p102
        $region34: #{tpu_custom_call.1} parent=31 // pred_check_branch
          %193 = sbr.rel (%p191) target = $region36
        $region35: #{tpu_custom_call.1} parent=31 // pred_region
          %194 = dma.done %s187, 128
        $region36: #{tpu_custom_call.1} parent=31 // pred_fallthru
          _
        %p195 = scmp.lt.s32.totalorder %s24, 1
        %s196 = scalar_select %p195, %s24, 1
        %s197 = smul.addr %s196, 8
        %s198 = scalar_lea.vmem %s0, %s197
        %p199 = pneg %p53
        %p200 = pneg %p50
        %p201 = pneg %p74
        %p202 = pneg %p71
        %s203 = sand.u32 %s89, 1
        %s204 = scalar_lea.sflag [#allocation3], %s203
        %s205 = sand.u32 %s89, 1
        %s206 = smul.addr %s205, 8
        %s207 = scalar_lea.vmem [#allocation2], %s206
        %p208 = pneg %p102
        %p209 = pneg %p99
        %p210 = pneg %p130
        %p211 = pneg %p127
        %s212 = sand.u32 %s117, 1
        %s213 = scalar_lea.sflag [#allocation4], %s212
        %s214 = sand.u32 %s117, 1
        %s215 = smul.addr %s214, 8
        %s216 = scalar_lea.vmem [#allocation5], %s215
        %p217 = scmp.lt.s32.totalorder %s24, 1
        %s218 = scalar_select %p217, %s24, 1
        %s219 = smul.addr %s218, 8
        %s220 = scalar_lea.vmem %s0, %s219
        %s221 = smul.u32 %s25, 128
        %s222 = sshra.s32 %s221, 7
        %s223 = sand.u32 %s221, 127
        %s224 = smul.addr %s222, 8
        %s225 = scalar_lea.vmem %s1, %s224
        %v226 = vld [vmem:[%s225] sm:$0xff]
        %v227 = vld [vmem:[%s220] sm:$0xff]
        %vm228 = vcmask 64512
        %v230 = vsel %vm228, %v227, 0
        %232 = vmatprep.subr.mxu0 0.0
        %233 = vmatpush1.msra.mxu0 %v226
        %234 = vmatprep.subr.mxu0 0.0
        %235 = vmatpush1.msra.mxu0 0.0
        %236 = vmatprep.subr.mxu0 0.0
        %237 = vmatpush1.msra.mxu0 0.0
        %238 = vmatprep.subr.mxu0 0.0
        %239 = vmatpush1.msra.mxu0 0.0
        %240 = vmatprep.subr.mxu0 0.0
        %241 = vmatpush1.msra.mxu0 0.0
        %242 = vmatprep.subr.mxu0 0.0
        %243 = vmatpush1.msra.mxu0 0.0
        %244 = vmatprep.subr.mxu0 0.0
        %245 = vmatpush1.msra.mxu0 0.0
        %246 = vmatprep.subr.mxu0 0.0
        %247 = vmatpush1.msra.mxu0 0.0
        %248 = vmatprep.subr.mxu0 0.0
        %249 = vmatpush1.msra.mxu0 0.0
        %250 = vmatprep.subr.mxu0 0.0
        %251 = vmatpush1.msra.mxu0 0.0
        %252 = vmatprep.subr.mxu0 0.0
        %253 = vmatpush1.msra.mxu0 0.0
        %254 = vmatprep.subr.mxu0 0.0
        %255 = vmatpush1.msra.mxu0 0.0
        %256 = vmatprep.subr.mxu0 0.0
        %257 = vmatpush1.msra.mxu0 0.0
        %258 = vmatprep.subr.mxu0 0.0
        %259 = vmatpush1.msra.mxu0 0.0
        %260 = vmatprep.subr.mxu0 0.0
        %261 = vmatpush1.msra.mxu0 0.0
        %262 = vmatprep.subr.mxu0 0.0
        %263 = vmatpush1.msra.mxu0 0.0
        %264 = vmatprep.subr.mxu0 0.0
        %265 = vmatpush1.msra.mxu0 0.0
        %266 = vmatprep.subr.mxu0 0.0
        %267 = vmatpush1.msra.mxu0 0.0
        %268 = vmatprep.subr.mxu0 0.0
        %269 = vmatpush1.msra.mxu0 0.0
        %270 = vmatprep.subr.mxu0 0.0
        %271 = vmatpush1.msra.mxu0 0.0
        %272 = vmatprep.subr.mxu0 0.0
        %273 = vmatpush1.msra.mxu0 0.0
        %274 = vmatprep.subr.mxu0 0.0
        %275 = vmatpush1.msra.mxu0 0.0
        %276 = vmatprep.subr.mxu0 0.0
        %277 = vmatpush1.msra.mxu0 0.0
        %278 = vmatprep.subr.mxu0 0.0
        %279 = vmatpush1.msra.mxu0 0.0
        %280 = vmatprep.subr.mxu0 0.0
        %281 = vmatpush1.msra.mxu0 0.0
        %282 = vmatprep.subr.mxu0 0.0
        %283 = vmatpush1.msra.mxu0 0.0
        %284 = vmatprep.subr.mxu0 0.0
        %285 = vmatpush1.msra.mxu0 0.0
        %286 = vmatprep.subr.mxu0 0.0
        %287 = vmatpush1.msra.mxu0 0.0
        %288 = vmatprep.subr.mxu0 0.0
        %289 = vmatpush1.msra.mxu0 0.0
        %290 = vmatprep.subr.mxu0 0.0
        %291 = vmatpush1.msra.mxu0 0.0
        %292 = vmatprep.subr.mxu0 0.0
        %293 = vmatpush1.msra.mxu0 0.0
        %294 = vmatprep.subr.mxu0 0.0
        %295 = vmatpush1.msra.mxu0 0.0
        %296 = vmatprep.mubr.f32.mxu0 0.0
        %297 = vmatmul.mubr.f32.gmra.mrb[0].mxu0 %v230
        %v298 = vpop.f32.mrb[0].mxu0
        %v299 = vadd.f32 0.0, %v298
        %v300 = vpop.f32.mrb[0].mxu0
        %301 = vdwg.mxu0
        %v302 = vld [vmem:[%s190] sm:$0xff]
        %v303 = vmul.f32 %v302, %v299
        %304 = vst [vmem:[%s216] sm:$0xff] %v303
        %s305 = sand.u32 %s117, 1
        %s306 = scalar_lea.sflag [#allocation4], %s305
        %s307 = sand.u32 %s117, 1
        %s308 = smul.addr %s307, 8
        %s309 = scalar_lea.vmem [#allocation5], %s308
        // Predicated region
        $region37: #{tpu_custom_call.1} parent=31 // pred_check
          %p310 = pneg %p127
        $region38: #{tpu_custom_call.1} parent=31 // pred_check_branch
          %312 = sbr.rel (%p310) target = $region40
        $region39: #{tpu_custom_call.1} parent=31 // pred_region
          %s314 = ssub.s32 128, 128
          %315 = vsyncadd %s306, %s314
          %s316 = smul.addr %s24, 2
          %s317 = sadd.s32 %s25, %s316
          %s318 = smul.addr %s317, 128
          %s319 = scalar_lea.hbm %s3, %s318
          %s321 = sshll.u32 %s309, 4
          %s322 = int_to_ptr.vmem [resolvable:$true] %s321
          %324 = dma.vmem_to_hbm [thread:$0]  %s322, 128, %s319, %s306
        $region40: #{tpu_custom_call.1} parent=31 // pred_fallthru
          _
      $region32: #{tpu_custom_call.1} parent=5 // pred_fallthru
        _
      %p325 = scmp.le.s32.totalorder 2, %s15
      // Predicated region
      $region41: #{tpu_custom_call.1} parent=5 // pred_check
        %p326 = pneg %p325
      $region42: #{tpu_custom_call.1} parent=5 // pred_check_branch
        %328 = sbr.rel (%p326) target = $region44
      $region43: #{tpu_custom_call.1} parent=5 // pred_region
        %s329 = ssub.s32 %s15, 2
        // Predicated region
        $region45: #{tpu_custom_call.1} parent=43 // pred_check
          %p330 = pneg %p133
        $region46: #{tpu_custom_call.1} parent=43 // pred_check_branch
          %332 = sbr.rel (%p330) target = $region48
        $region47: #{tpu_custom_call.1} parent=43 // pred_region
          %s333 = sand.u32 %s118, 1
          %s334 = scalar_lea.sflag [#allocation4], %s333
          %s335 = sand.u32 %s118, 1
          %s336 = smul.addr %s335, 8
          %s337 = scalar_lea.vmem [#allocation5], %s336
          %338 = dma.done %s334, 128
        $region48: #{tpu_custom_call.1} parent=43 // pred_fallthru
          _
      $region44: #{tpu_custom_call.1} parent=5 // pred_fallthru
        _
    $region6: #{tpu_custom_call.1} parent=1 // loop_footer
      %s19 = sadd.s32 1, %s15
    $region7: #{tpu_custom_call.1} parent=1 // loop_footer_branch
      %14 = sbr.rel target = $region3
    $region8: #{tpu_custom_call.1} parent=1 // loop_exit
      _
    %339 = vsyncpa [#allocation3], 1
    %s340 = scalar_lea.sflag [#allocation3], 1
    %341 = vsyncpa %s340, 1
    %342 = vsyncpa [#allocation4], 1
    %s343 = scalar_lea.sflag [#allocation4], 1
    %344 = vsyncpa %s343, 1

</llo_original>
